<compile_context>
chip_gen: v7x
topology: tpu7x:2x2x1
jax: 0.10.0
libtpu: 0.0.40
codegen_flags: <defaults>
</compile_context>

<pallas_src>
import functools

import numpy as np
import jax
import jax.numpy as jnp
from jax.experimental import pallas as pl
from jax.experimental.pallas import tpu as pltpu

_SUBLANES = 8
_LANES = 128


def _plan_layout(E, max_tile_cols=8192, min_tiles=2):
    """Pad/reshape plan: energy axis E -> (8, C) slab tiled into (8, TC) blocks.

    min_tiles >= 2 guarantees a grid of length >= 2 whenever C > 128 so the
    "parallel" axis can shard across v7x's two TensorCores.  On v5e/v6e this
    only adds one ~0.35 us pipeline step; set min_tiles=1 to get a single big
    tile there.
    """
    assert max_tile_cols % _LANES == 0 and max_tile_cols >= _LANES
    # Columns (multiple of 128) needed so that 8*C >= E.
    c_min = -(-E // (_SUBLANES * _LANES)) * _LANES
    if c_min <= _LANES or min_tiles <= 1:
        tc = min(c_min, max_tile_cols)
    else:
        target = -(-c_min // min_tiles)                   # cols/tile for min_tiles tiles
        tc = max(_LANES, (target // _LANES) * _LANES)     # round down to lane multiple
        tc = min(tc, max_tile_cols)
    c = -(-c_min // tc) * tc                              # pad C to a multiple of TC
    e_pad = c * _SUBLANES
    return e_pad, c, tc


def _scint_kernel(idx_ref, alpha_ref, tbl0_ref, tbl1_ref, en_ref, out_ref):
    """Fused blend + clip + (1 - exp) + multiply on one (8, TC) lane tile.

    idx_ref  : (1,)        i32 SMEM  - scalar-prefetch row index (used by index_maps)
    alpha_ref: (1,)        f32 SMEM  - interpolation weight
    tbl0_ref : (1, 8, TC)  f32 VMEM  - -log(1-spec) row idx0     (gathered by BlockSpec)
    tbl1_ref : (1, 8, TC)  f32 VMEM  - -log(1-spec) row idx0 + 1 (gathered by BlockSpec)
    en_ref   : (8, TC)     f32 VMEM  - energies tile
    out_ref  : (8, TC)     f32 VMEM
    """
    del idx_ref                                   # consumed by the index_maps
    alpha = alpha_ref[0]
    y0 = tbl0_ref[0]                              # (8, TC)
    y1 = tbl1_ref[0]
    interp = jnp.maximum(y0 + alpha * (y1 - y0), 0.0)   # Interp1D clamps at 0
    # NOTE: -expm1(-interp) is numerically nicer but 1-exp matches the torch ref.
    out_ref[...] = (1.0 - jnp.exp(-interp)) * en_ref[...]


def _scint_forward_impl(norm_param, thicknesses, table3d, en2,
                        *, lo, hi, E, e_pad, C, TC):
    T = table3d.shape[0]

    # --- scalar prologue (tiny XLA ops on the T-element array) -----------------
    p = jnp.asarray(norm_param, jnp.float32)
    if lo == hi:
        denorm = p * lo
    else:
        denorm = p * (hi - lo) + lo
    thickness = jnp.clip(denorm, lo, hi)          # clamp_with_grad forward = clamp
    # torch.searchsorted(right=False) == jnp.searchsorted(side='left')
    idx = jnp.clip(jnp.searchsorted(thicknesses, thickness, side="left"), 1, T - 1)
    idx = idx.astype(jnp.int32)
    idx0 = idx - 1
    x0 = thicknesses[idx0]
    x1 = thicknesses[idx]
    # TODO(synk): NaN if two adjacent reference thicknesses are equal (matches torch).
    alpha = (thickness - x0) / (x1 - x0)

    idx0_arr = idx0.reshape(1)                    # scalar prefetch (drives index_maps)
    alpha_arr = alpha.astype(jnp.float32).reshape(1)

    grid = (C // TC,)
    out = pl.pallas_call(
        _scint_kernel,
        out_shape=jax.ShapeDtypeStruct((_SUBLANES, C), jnp.float32),
        grid_spec=pltpu.PrefetchScalarGridSpec(
            num_scalar_prefetch=1,
            grid=grid,
            in_specs=[
                pl.BlockSpec(memory_space=pltpu.MemorySpace.SMEM),         # alpha (1,)
                # Two-row gather of the -log(1-spec) table, one (1, 8, TC) block each.
                pl.BlockSpec((1, _SUBLANES, TC),
                             lambda j, idx_ref: (idx_ref[0], 0, j)),
                pl.BlockSpec((1, _SUBLANES, TC),
                             lambda j, idx_ref: (idx_ref[0] + 1, 0, j)),
                pl.BlockSpec((_SUBLANES, TC), lambda j, idx_ref: (0, j)),  # energies
            ],
            out_specs=pl.BlockSpec((_SUBLANES, TC), lambda j, idx_ref: (0, j)),
        ),
        compiler_params=pltpu.CompilerParams(
            dimension_semantics=("parallel",)),   # lane tiles shard across v7x TCs
    )(idx0_arr, alpha_arr, table3d, table3d, en2)

    return out.reshape(e_pad)[:E]


class ScintillatorMCNPJax:
    """JAX/Pallas mirror of xcal.models.Scintillator_MCNP (forward only)."""

    def __init__(self, thickness):
        init_val, lo, hi = thickness
        if init_val is None:
            raise ValueError("initial_value cannot be None.")
        if lo is None:
            lo = init_val
        if hi is None:
            hi = init_val
        self.lo = float(lo)
        self.hi = float(hi)
        if self.lo == self.hi:
            self.norm_param = jnp.float32(1.0)
        else:
            self.norm_param = jnp.float32((init_val - self.lo) / (self.hi - self.lo))
        self._en_cache = None

    def set_scint_spec_list(self, scint_spec_list, thicknesses,
                            max_tile_cols=8192, min_tiles=2):
        spec = np.asarray(scint_spec_list, dtype=np.float32)        # (T, E)
        th = np.asarray(thicknesses, dtype=np.float32)              # (T,)
        # TODO(synk): T == 1 repeat branch of Interp1D (trivial) is not handled here.
        assert spec.ndim == 2 and th.shape[0] == spec.shape[0] and th.shape[0] > 1
        T, E = spec.shape
        e_pad, C, TC = _plan_layout(E, max_tile_cols, min_tiles)

        log_spec = -np.log(1.0 - spec)                              # (T, E)
        padded = np.zeros((T, e_pad), dtype=np.float32)
        padded[:, :E] = log_spec

        self.scint_spec_list = spec
        self.thicknesses = jnp.asarray(th)
        self.log_scint_spec_list = jnp.asarray(log_spec)            # reference path
        self._table3d = jnp.asarray(padded.reshape(T, _SUBLANES, C))
        self._E, self._e_pad, self._C, self._TC = E, e_pad, C, TC
        self._en_cache = None
        self._fwd = jax.jit(functools.partial(
            _scint_forward_impl, lo=self.lo, hi=self.hi,
            E=E, e_pad=e_pad, C=C, TC=TC))

    def _packed_energies(self, energies):
        # Cache the padded (8, C) slab; energies are normally fixed per model.
        if self._en_cache is not None and self._en_cache[0] is energies:
            return self._en_cache[1]
        en = jnp.asarray(energies, dtype=jnp.float32)
        if en.shape != (self._E,):
            raise ValueError("energies length must match the spectrum table.")
        if self._e_pad > self._E:
            en = jnp.pad(en, (0, self._e_pad - self._E))
        en2 = en.reshape(_SUBLANES, self._C)
        self._en_cache = (energies, en2)   # hold ref so identity cache stays valid
        return en2

    def forward(self, energies):
        en2 = self._packed_energies(energies)
        return self._fwd(self.norm_param, self.thicknesses, self._table3d, en2)

    # pure-JAX reference for validation
    def forward_ref(self, energies):
        energies = jnp.asarray(energies, dtype=jnp.float32)
        if self.lo == self.hi:
            th = self.norm_param * self.lo
        else:
            th = self.norm_param * (self.hi - self.lo) + self.lo
        th = jnp.clip(th, self.lo, self.hi)
        T = self.thicknesses.shape[0]
        idx = jnp.clip(jnp.searchsorted(self.thicknesses, th, side="left"), 1, T - 1)
        x0 = self.thicknesses[idx - 1]
        x1 = self.thicknesses[idx]
        alpha = (th - x0) / (x1 - x0)
        y0 = self.log_scint_spec_list[idx - 1]
        y1 = self.log_scint_spec_list[idx]
        interp = jnp.maximum(y0 + alpha * (y1 - y0), 0.0)
        return (1.0 - jnp.exp(-interp)) * energies


if __name__ == "__main__":
    key = jax.random.PRNGKey(0)
    k1, k2, k3, k4 = jax.random.split(key, 4)

    def check(T, E, thickness_tuple, seed_key, max_tile_cols=8192, min_tiles=2):
        spec = jax.random.uniform(seed_key, (T, E), jnp.float32, 0.05, 0.85)
        th = np.linspace(0.05, 0.75, T, dtype=np.float32)
        en = jnp.linspace(10.0, 100.0, E, dtype=jnp.float32)
        model = ScintillatorMCNPJax(thickness=thickness_tuple)
        model.set_scint_spec_list(np.asarray(spec), th,
                                  max_tile_cols=max_tile_cols, min_tiles=min_tiles)
        out = jax.block_until_ready(model.forward(en))
        assert out.shape == (E,) and out.dtype == jnp.float32
        ref = model.forward_ref(en)
        np.testing.assert_allclose(np.asarray(out), np.asarray(ref),
                                   rtol=1e-5, atol=1e-5)
        # second call exercises the cached-energies fast path
        out2 = jax.block_until_ready(model.forward(en))
        np.testing.assert_allclose(np.asarray(out2), np.asarray(ref),
                                   rtol=1e-5, atol=1e-5)

    # Small spectrum: pads 256 -> 1024, single (8,128) tile, grid=(1,).
    check(T=8, E=256, thickness_tuple=(0.3, 0.1, 0.6), seed_key=k1)
    # Non-multiple-of-128 E exercises the padding path and the >=2-tile split.
    check(T=8, E=1500, thickness_tuple=(0.25, 0.1, 0.6), seed_key=k2)
    # Fixed-thickness (lo == hi) + narrow tiles -> multi-step "parallel" grid.
    check(T=12, E=2500, thickness_tuple=(0.5, 0.5, 0.5), seed_key=k3, max_tile_cols=128)
    # Larger thickness table: two-row gather touches only 2 of 40 rows per step.
    check(T=40, E=4096, thickness_tuple=(0.62, 0.05, 0.75), seed_key=k4)

    print("KERNEL_OK")
</pallas_src>

<mosaic_0001>
module attributes {stable_mosaic.version = 11 : i64} {
  func.func @_scint_kernel(%arg0: i32, %arg1: memref<1xi32, #tpu.memory_space<smem>>, %arg2: memref<1xf32, #tpu.memory_space<smem>>, %arg3: memref<1x8x128xf32, #tpu.memory_space<vmem>>, %arg4: memref<1x8x128xf32, #tpu.memory_space<vmem>>, %arg5: memref<8x128xf32, #tpu.memory_space<vmem>>, %arg6: memref<8x128xf32, #tpu.memory_space<vmem>>) attributes {dimension_semantics = [#tpu.dimension_semantics<parallel>], iteration_bounds = array<i64: 1>, scalar_prefetch = 1 : i64, scratch_operands = 0 : i64, tpu.core_type = #tpu.core_type<tc>, window_params = [{transform_indices = @transform_0, window_bounds = array<i64: 1>}, {transform_indices = @transform_1, window_bounds = array<i64: 1, 8, 128>}, {transform_indices = @transform_2, window_bounds = array<i64: 1, 8, 128>}, {transform_indices = @transform_3, window_bounds = array<i64: 8, 128>}, {transform_indices = @transform_4, window_bounds = array<i64: 8, 128>}]} {
    %c0 = arith.constant 0 : index
    %0 = memref.load %arg2[%c0] : memref<1xf32, #tpu.memory_space<smem>>
    %c0_0 = arith.constant 0 : index
    %c0_1 = arith.constant 0 : index
    %c0_2 = arith.constant 0 : index
    %1 = vector.load %arg3[%c0_0, %c0_1, %c0_2] : memref<1x8x128xf32, #tpu.memory_space<vmem>>, vector<1x8x128xf32>
    %2 = vector.shape_cast %1 : vector<1x8x128xf32> to vector<8x128xf32>
    %c0_3 = arith.constant 0 : index
    %c0_4 = arith.constant 0 : index
    %c0_5 = arith.constant 0 : index
    %3 = vector.load %arg4[%c0_3, %c0_4, %c0_5] : memref<1x8x128xf32, #tpu.memory_space<vmem>>, vector<1x8x128xf32>
    %4 = vector.shape_cast %3 : vector<1x8x128xf32> to vector<8x128xf32>
    %5 = arith.subf %4, %2 : vector<8x128xf32>
    %6 = vector.broadcast %0 : f32 to vector<8x128xf32>
    %7 = arith.mulf %6, %5 : vector<8x128xf32>
    %8 = arith.addf %2, %7 : vector<8x128xf32>
    %cst = arith.constant 0.000000e+00 : f32
    %9 = vector.broadcast %cst : f32 to vector<8x128xf32>
    %10 = arith.maximumf %8, %9 : vector<8x128xf32>
    %cst_6 = arith.constant 0.000000e+00 : f32
    %11 = vector.broadcast %cst_6 : f32 to vector<8x128xf32>
    %12 = arith.subf %11, %10 : vector<8x128xf32>
    %13 = math.exp %12 : vector<8x128xf32>
    %cst_7 = arith.constant 1.000000e+00 : f32
    %14 = vector.broadcast %cst_7 : f32 to vector<8x128xf32>
    %15 = arith.subf %14, %13 : vector<8x128xf32>
    %c0_8 = arith.constant 0 : index
    %c0_9 = arith.constant 0 : index
    %16 = vector.load %arg5[%c0_8, %c0_9] : memref<8x128xf32, #tpu.memory_space<vmem>>, vector<8x128xf32>
    %17 = arith.mulf %15, %16 : vector<8x128xf32>
    %c0_10 = arith.constant 0 : index
    %c0_11 = arith.constant 0 : index
    %18 = vector.load %arg6[%c0_10, %c0_11] : memref<8x128xf32, #tpu.memory_space<vmem>>, vector<8x128xf32>
    tpu.vector_store %arg6[%c0_10, %c0_11], %17 {strides = array<i32>} : memref<8x128xf32, #tpu.memory_space<vmem>>, vector<8x128xf32>,
    return
  }
  func.func @transform_0(%arg0: i32, %arg1: memref<1xi32, #tpu.memory_space<smem>>) -> i32 {
    %c0_i32 = arith.constant 0 : i32
    %c0_i32_0 = arith.constant 0 : i32
    return %c0_i32 : i32
  }
  func.func @transform_1(%arg0: i32, %arg1: memref<1xi32, #tpu.memory_space<smem>>) -> (i32, i32, i32) {
    %c0 = arith.constant 0 : index
    %0 = memref.load %arg1[%c0] : memref<1xi32, #tpu.memory_space<smem>>
    %c0_i32 = arith.constant 0 : i32
    %c0_i32_0 = arith.constant 0 : i32
    return %0, %c0_i32, %arg0 : i32, i32, i32
  }
  func.func @transform_2(%arg0: i32, %arg1: memref<1xi32, #tpu.memory_space<smem>>) -> (i32, i32, i32) {
    %c0 = arith.constant 0 : index
    %0 = memref.load %arg1[%c0] : memref<1xi32, #tpu.memory_space<smem>>
    %c1_i32 = arith.constant 1 : i32
    %1 = arith.addi %0, %c1_i32 : i32
    %c0_i32 = arith.constant 0 : i32
    %c0_i32_0 = arith.constant 0 : i32
    return %1, %c0_i32, %arg0 : i32, i32, i32
  }
  func.func @transform_3(%arg0: i32, %arg1: memref<1xi32, #tpu.memory_space<smem>>) -> (i32, i32) {
    %c0_i32 = arith.constant 0 : i32
    %c0_i32_0 = arith.constant 0 : i32
    return %c0_i32, %arg0 : i32, i32
  }
  func.func @transform_4(%arg0: i32, %arg1: memref<1xi32, #tpu.memory_space<smem>>) -> (i32, i32) {
    %c0_i32 = arith.constant 0 : i32
    %c0_i32_0 = arith.constant 0 : i32
    return %c0_i32, %arg0 : i32, i32
  }
}

</mosaic_0001>

<llo_original>
// kernel: _scint_forward_impl.1
$region0: #{_scint_forward_impl.1}
  #allocation0 [shape = 'u32[]', space=smem, size = 0x4, offset = 0x4, fixed_abs, tag = 'smem constant byte address 0x4 - core index']
  #allocation1 [shape = 'u32[144,128]{1,0:T(1,128)}', space=vmem, size = 0x12000, scoped, tag = 'internal scratch']
  #allocation2 [shape = 's32[1]{0}', space=sflag, size = 0x4, scoped, tag = 'scoped memory for _scint_forward_impl.1']
  #allocation3 [shape = 's32[1]{0:T(128)S(6)}', space=smem, size = 0x200, scoped, tag = 'prefetched SMEM operand 0']
  #allocation4 [shape = 'f32[1]{0:T(128)S(6)}', space=smem, size = 0x200, scoped, tag = 'scoped memory for _scint_forward_impl.1']
  %s0 = inlined_call_operand.<no memory space> [shape: s32[1], index: 0, kind: input, shape index: {}]
  %s1 = inlined_call_operand.<no memory space> [shape: f32[1], index: 1, kind: input, shape index: {}]
  %s2 = inlined_call_operand.vmem [shape: f32[8,8,128], index: 2, kind: input, shape index: {}, may-alias: {2,3}]
  %s3 = inlined_call_operand.vmem [shape: f32[8,8,128], index: 3, kind: input, shape index: {}, may-alias: {2,3}]
  %s4 = inlined_call_operand.vmem [shape: f32[8,128], index: 4, kind: input, shape index: {}]
  %s5 = inlined_call_operand.vmem [shape: f32[8,128], index: 5, kind: output, shape index: {}]
  %s6 = sld [smem:[#allocation0]]
  $region26: #{_scint_forward_impl.1} parent=0
    _
  %s8 = ssub.s32 1, %s6
  %s9 = scalar_select 0, %s8, %s6
  %10 = sst [smem:[#allocation3]] %s0
  %11 = sst [smem:[#allocation4]] %s1
  // Predicated region
  $region2: #{_scint_forward_impl.1} parent=0 // pred_check
    _
  $region3: #{_scint_forward_impl.1} parent=0 // pred_check_branch
    %13 = sbr.rel (0) target = $region5
  $region4: #{_scint_forward_impl.1} parent=0 // pred_region
    _
  $region5: #{_scint_forward_impl.1} parent=0 // pred_fallthru
    _
  // Predicated region
  $region6: #{_scint_forward_impl.1} parent=0 // pred_check
    _
  $region7: #{_scint_forward_impl.1} parent=0 // pred_check_branch
    %15 = sbr.rel (0) target = $region9
  $region8: #{_scint_forward_impl.1} parent=0 // pred_region
    %s16 = sld [smem:[#allocation3]]
    %p17 = scmp.lt.s32.totalorder %s16, 7
    %s18 = scalar_select %p17, %s16, 7
    %s19 = smul.addr %s18, 8
    %s20 = scalar_lea.vmem %s2, %s19
    %s21 = sld [smem:[#allocation3]]
  $region9: #{_scint_forward_impl.1} parent=0 // pred_fallthru
    _
  // Predicated region
  $region10: #{_scint_forward_impl.1} parent=0 // pred_check
    _
  $region11: #{_scint_forward_impl.1} parent=0 // pred_check_branch
    %23 = sbr.rel (0) target = $region13
  $region12: #{_scint_forward_impl.1} parent=0 // pred_region
    %s24 = sld [smem:[#allocation3]]
    %s25 = sadd.s32 %s24, 1
    %p26 = scmp.lt.s32.totalorder %s25, 7
    %s27 = scalar_select %p26, %s25, 7
    %s28 = smul.addr %s27, 8
    %s29 = scalar_lea.vmem %s3, %s28
    %s30 = sld [smem:[#allocation3]]
    %s31 = sadd.s32 %s30, 1
  $region13: #{_scint_forward_impl.1} parent=0 // pred_fallthru
    _
  // Predicated region
  $region14: #{_scint_forward_impl.1} parent=0 // pred_check
    _
  $region15: #{_scint_forward_impl.1} parent=0 // pred_check_branch
    %33 = sbr.rel (0) target = $region17
  $region16: #{_scint_forward_impl.1} parent=0 // pred_region
    _
  $region17: #{_scint_forward_impl.1} parent=0 // pred_fallthru
    _
  %s34 = sld [smem:[#allocation3]]
  %p35 = scmp.lt.s32.totalorder %s34, 7
  %s36 = scalar_select %p35, %s34, 7
  %s37 = smul.addr %s36, 8
  %s38 = scalar_lea.vmem %s2, %s37
  %s39 = sld [smem:[#allocation3]]
  %s40 = sadd.s32 %s39, 1
  %p41 = scmp.lt.s32.totalorder %s40, 7
  %s42 = scalar_select %p41, %s40, 7
  %s43 = smul.addr %s42, 8
  %s44 = scalar_lea.vmem %s3, %s43
  %s45 = sld [smem:[#allocation3]]
  %p46 = scmp.lt.s32.totalorder %s45, 7
  %s47 = scalar_select %p46, %s45, 7
  %s48 = smul.addr %s47, 8
  %s49 = scalar_lea.vmem %s2, %s48
  %s50 = sld [smem:[#allocation3]]
  %s51 = sld [smem:[#allocation3]]
  %s52 = sadd.s32 %s51, 1
  %p53 = scmp.lt.s32.totalorder %s52, 7
  %s54 = scalar_select %p53, %s52, 7
  %s55 = smul.addr %s54, 8
  %s56 = scalar_lea.vmem %s3, %s55
  %s57 = sld [smem:[#allocation3]]
  %s58 = sadd.s32 %s57, 1
  %s59 = sld [smem:[#allocation4]]
  %v60 = vld [vmem:[%s49] sm:$0xff]
  %v61 = vld [vmem:[%s56] sm:$0xff]
  %v62 = vsub.f32 %v61, %v60
  %v63 = vstv %s59
  %v64 = vmul.f32 %v63, %v62
  %v65 = vadd.f32 %v60, %v64
  %v66 = vmax.f32 %v65, 0.0
  %v67 = vsub.f32 0.0, %v66
  %v68 = vmul.f32 %v67, 1.442695
  %v69 = vpow.pop %v68
  %v70 = vsub.f32 1.0, %v69
  %v71 = vld [vmem:[%s4] sm:$0xff]
  %v72 = vmul.f32 %v70, %v71
  %73 = vst [vmem:[%s5] sm:$0xff] %v72
  // Predicated region
  $region18: #{_scint_forward_impl.1} parent=0 // pred_check
    _
  $region19: #{_scint_forward_impl.1} parent=0 // pred_check_branch
    %75 = sbr.rel (0) target = $region21
  $region20: #{_scint_forward_impl.1} parent=0 // pred_region
    _
  $region21: #{_scint_forward_impl.1} parent=0 // pred_fallthru
    _
  // Predicated region
  $region22: #{_scint_forward_impl.1} parent=0 // pred_check
    _
  $region23: #{_scint_forward_impl.1} parent=0 // pred_check_branch
    %77 = sbr.rel (0) target = $region25
  $region24: #{_scint_forward_impl.1} parent=0 // pred_region
    _
  $region25: #{_scint_forward_impl.1} parent=0 // pred_fallthru
    _

</llo_original>
